<compile_context>
chip_gen: v5e
topology: v5e:2x2
jax: 0.10.0
libtpu: 0.0.40
codegen_flags: <defaults>
</compile_context>

<pallas_src>
import functools
import math

import jax
import jax.numpy as jnp
from jax import lax
from jax.experimental import pallas as pl
from jax.experimental.pallas import tpu as pltpu


_SQRT_2 = math.sqrt(2.0)
_SQRT_2_OVER_PI = math.sqrt(2.0 / math.pi)


def mlp_kernel(x_ref, w1_ref, b1_ref, w2_ref, b2_ref, o_ref, acc_ref,
               *, approximate_gelu: bool):
    """grid = (m_tiles, h_tiles); the trailing axis streams blocks of the hidden dim.

    x_ref  : (tile_m, C)      -- resident across the h loop (block index invariant)
    w1_ref : (C, tile_h)      -- streamed column-block of c_fc weights
    b1_ref : (1, tile_h)      -- streamed c_fc bias block
    w2_ref : (tile_h, C)      -- streamed row-block of c_proj weights
    b2_ref : (1, C)           -- block-invariant c_proj bias
    o_ref  : (tile_m, C)      -- written on the last h step only
    acc_ref: (tile_m, C) f32  -- VMEM accumulator across the h axis
    """
    h_idx = pl.program_id(1)

    @pl.when(h_idx == 0)
    def _init():
        acc_ref[...] = jnp.zeros_like(acc_ref)

    # c_fc block: x @ W1[:, h-block] + b1[h-block]  (f32 accumulation on the MXU).
    h = jnp.dot(x_ref[...], w1_ref[...], preferred_element_type=jnp.float32)
    h = h + b1_ref[...].astype(jnp.float32)

    # GELU is elementwise over the hidden dim, so per-H-block application is exact.
    if approximate_gelu:
        # tanh form: transcendental lands on the EUP slot (VALU relief on v6e/v7x).
        h = 0.5 * h * (1.0 + jnp.tanh(_SQRT_2_OVER_PI * (h + 0.044715 * h * h * h)))
    else:
        # Exact erf form — matches torch.nn.GELU() default.
        h = 0.5 * h * (1.0 + lax.erf(h * (1.0 / _SQRT_2)))

    # c_proj partial product: accumulate gelu(h_block) @ W2[h-block, :].
    # Cast back to the weight dtype so bf16 weights keep the fast MXU path.
    acc_ref[...] += jnp.dot(h.astype(w2_ref.dtype), w2_ref[...],
                            preferred_element_type=jnp.float32)

    @pl.when(h_idx == pl.num_programs(1) - 1)
    def _finalize():
        o_ref[...] = (acc_ref[...] + b2_ref[...].astype(jnp.float32)).astype(o_ref.dtype)


def _round_up(a, b):
    return (a + b - 1) // b * b


def _tpu_info():
    """Best-effort (vmem_capacity_bytes, num_tensorcores); conservative fallbacks."""
    vmem, cores = None, None
    try:
        info = pltpu.get_tpu_info()
        vmem = int(getattr(info, "vmem_capacity_bytes", 0)) or None
        cores = int(getattr(info, "num_cores", 0)) or None
    except Exception:
        pass
    if cores is None:
        # v7x is the only generation with <= 64 MiB VMEM per TC and it has 2 TCs.
        cores = 2 if (vmem is not None and vmem <= 64 * 1024 * 1024) else 1
    return vmem, cores


def _pick_tile_h(H, target=512):
    """Largest hidden-dim block that (a) divides H and (b) is a multiple of 128."""
    if H <= target:
        return H
    t = (target // 128) * 128
    while t >= 128:
        if H % t == 0:
            return t
        t -= 128
    # No 128-multiple divisor <= target: fall back to block-resident weights.
    # TODO(synk): pad H inside the wrapper if odd hidden sizes ever matter.
    return H


def mlp_forward(x, w1, b1, w2, b2, *, tile_m=None, tile_h=None,
                approximate_gelu=False):
    """x: (B, T, C); w1: (C, H); b1: (H,); w2: (H, C); b2: (C,)."""
    B, T, C = x.shape
    C_in, H = w1.shape
    assert C_in == C and w2.shape == (H, C) and b1.shape == (H,) and b2.shape == (C,)
    M = B * T
    x2 = x.reshape(M, C)

    vmem_cap, num_cores = _tpu_info()
    if vmem_cap is None:
        vmem_limit = 64 * 1024 * 1024          # safe on every generation
        big_vmem = False
    else:
        # ~7/8 of physical per-TC VMEM, capped at 112 MiB (headroom for compiler
        # scratch and the double-buffered streamed weight blocks).
        vmem_limit = min(int(vmem_cap * 7 // 8), 112 * 1024 * 1024)
        big_vmem = vmem_cap > 96 * 1024 * 1024   # v5e / v6e (128 MiB)

    # Row alignment for the (sublane, lane) tiling constraint.
    row_align = 16 if x.dtype == jnp.bfloat16 else 8

    if tile_m is None:
        # Weights are streamed, so the resident footprint is x/out/acc tiles only;
        # larger M tiles amortize the ~0.35 us per-grid-step overhead.
        tile_m = 512 if (big_vmem and M >= 1024) else 256
        if M <= tile_m:
            if num_cores >= 2 and M > row_align:
                # v7x: split tiny problems so the "parallel" axis spans both TCs.
                tile_m = max(row_align, _round_up(pl.cdiv(M, 2), row_align))
            else:
                # Single-core chips: one full-extent tile, no extra grid steps.
                tile_m = M
    if tile_h is None:
        tile_h = _pick_tile_h(H)
    assert H % tile_h == 0, "tile_h must divide H (H is a contraction axis for c_proj)"

    grid = (pl.cdiv(M, tile_m), H // tile_h)

    isz = lambda a: jnp.dtype(a.dtype).itemsize
    cost = pl.CostEstimate(
        flops=4 * M * C * H,
        transcendentals=M * H,
        bytes_accessed=(M * C * isz(x) + C * H * isz(w1) + H * isz(b1)
                        + H * C * isz(w2) + C * isz(b2) + M * C * isz(x)),
    )

    out = pl.pallas_call(
        functools.partial(mlp_kernel, approximate_gelu=approximate_gelu),
        out_shape=jax.ShapeDtypeStruct((M, C), x.dtype),
        grid_spec=pltpu.PrefetchScalarGridSpec(
            num_scalar_prefetch=0,
            grid=grid,
            in_specs=[
                # Activation tile: resident across the h loop (index invariant in h).
                pl.BlockSpec((tile_m, C), lambda i, h: (i, 0)),
                # Streamed weight / bias blocks (double-buffered by default so the
                # next block's DMA overlaps the current matmuls).
                pl.BlockSpec((C, tile_h), lambda i, h: (0, h)),
                pl.BlockSpec((1, tile_h), lambda i, h: (0, h)),
                pl.BlockSpec((tile_h, C), lambda i, h: (h, 0)),
                # c_proj bias is block-invariant: single-buffer it.
                pl.BlockSpec((1, C), lambda i, h: (0, 0),
                             pipeline_mode=pl.Buffered(1)),
            ],
            # Lane-dense output, invariant over the reduction (h) axis.
            out_specs=pl.BlockSpec((tile_m, C), lambda i, h: (i, 0)),
            scratch_shapes=[pltpu.VMEM((tile_m, C), jnp.float32)],
        ),
        compiler_params=pltpu.CompilerParams(
            dimension_semantics=("parallel", "arbitrary"),
            vmem_limit_bytes=vmem_limit,
        ),
        cost_estimate=cost,
    )(x2, w1, b1.reshape(1, H), w2, b2.reshape(1, C))

    return out.reshape(B, T, C)


def init_params(key, n_embd, dtype=jnp.float32):
    """Deterministic PyTorch-style nn.Linear init (uniform +/- 1/sqrt(fan_in))."""
    hidden = 4 * n_embd
    k1, k2, k3, k4 = jax.random.split(key, 4)
    bound1 = 1.0 / math.sqrt(n_embd)
    bound2 = 1.0 / math.sqrt(hidden)
    w1 = jax.random.uniform(k1, (n_embd, hidden), dtype, -bound1, bound1)
    b1 = jax.random.uniform(k2, (hidden,), dtype, -bound1, bound1)
    w2 = jax.random.uniform(k3, (hidden, n_embd), dtype, -bound2, bound2)
    b2 = jax.random.uniform(k4, (n_embd,), dtype, -bound2, bound2)
    return w1, b1, w2, b2


def mlp_reference(x, w1, b1, w2, b2):
    h = jnp.einsum("btc,ch->bth", x, w1) + b1
    h = 0.5 * h * (1.0 + lax.erf(h / _SQRT_2))
    return jnp.einsum("bth,hc->btc", h, w2) + b2


if __name__ == "__main__":
    B, T, n_embd = 2, 8, 32

    key = jax.random.PRNGKey(0)
    k_x, k_p = jax.random.split(key)
    x = jax.random.normal(k_x, (B, T, n_embd), dtype=jnp.float32)
    w1, b1, w2, b2 = init_params(k_p, n_embd)

    ref = mlp_reference(x, w1, b1, w2, b2)

    # f32 operand path (exact-erf GELU): tight parity with the f32 reference.
    out_f32 = jax.block_until_ready(mlp_forward(x, w1, b1, w2, b2))
    assert out_f32.shape == (B, T, n_embd)
    assert jnp.allclose(out_f32, ref, atol=1e-5, rtol=1e-5)

    # bf16-operand / f32-accumulate MXU fast path (the production configuration).
    out_bf16 = jax.block_until_ready(
        mlp_forward(x.astype(jnp.bfloat16),
                    w1.astype(jnp.bfloat16), b1.astype(jnp.bfloat16),
                    w2.astype(jnp.bfloat16), b2.astype(jnp.bfloat16)))
    assert out_bf16.dtype == jnp.bfloat16
    assert jnp.allclose(out_bf16.astype(jnp.float32), ref, atol=5e-2, rtol=5e-2)

    print("KERNEL_OK")
</pallas_src>

<mosaic_0001>
module attributes {stable_mosaic.version = 11 : i64} {
  func.func @mlp_kernel(%arg0: i32, %arg1: i32, %arg2: memref<16x32xf32, #tpu.memory_space<vmem>>, %arg3: memref<32x128xf32, #tpu.memory_space<vmem>>, %arg4: memref<1x128xf32, #tpu.memory_space<vmem>>, %arg5: memref<128x32xf32, #tpu.memory_space<vmem>>, %arg6: memref<1x32xf32, #tpu.memory_space<vmem>>, %arg7: memref<16x32xf32, #tpu.memory_space<vmem>>, %arg8: memref<16x32xf32, #tpu.memory_space<vmem>>) attributes {dimension_semantics = [#tpu.dimension_semantics<parallel>, #tpu.dimension_semantics<arbitrary>], iteration_bounds = array<i64: 1, 1>, scalar_prefetch = 0 : i64, scratch_operands = 1 : i64, tpu.core_type = #tpu.core_type<tc>, window_params = [{transform_indices = @transform_0, window_bounds = array<i64: 16, 32>}, {transform_indices = @transform_1, window_bounds = array<i64: 32, 128>}, {transform_indices = @transform_2, window_bounds = array<i64: 1, 128>}, {transform_indices = @transform_3, window_bounds = array<i64: 128, 32>}, {pipeline_mode = #tpu.pipeline_mode<synchronous>, transform_indices = @transform_4, window_bounds = array<i64: 1, 32>}, {transform_indices = @transform_5, window_bounds = array<i64: 16, 32>}]} {
    %c0_i32 = arith.constant 0 : i32
    %0 = arith.cmpi eq, %arg1, %c0_i32 : i32
    %1 = arith.extui %0 : i1 to i32
    %c0_i32_0 = arith.constant 0 : i32
    %2 = arith.cmpi ne, %1, %c0_i32_0 : i32
    scf.if %2 {
      %cst_18 = arith.constant 0.000000e+00 : f32
      %25 = vector.broadcast %cst_18 : f32 to vector<16x32xf32>
      %c0_19 = arith.constant 0 : index
      %c0_20 = arith.constant 0 : index
      %26 = vector.load %arg8[%c0_19, %c0_20] : memref<16x32xf32, #tpu.memory_space<vmem>>, vector<16x32xf32>
      tpu.vector_store %arg8[%c0_19, %c0_20], %25 {strides = array<i32>} : memref<16x32xf32, #tpu.memory_space<vmem>>, vector<16x32xf32>,
    } else {
    }
    %c0 = arith.constant 0 : index
    %c0_1 = arith.constant 0 : index
    %3 = vector.load %arg2[%c0, %c0_1] : memref<16x32xf32, #tpu.memory_space<vmem>>, vector<16x32xf32>
    %c0_2 = arith.constant 0 : index
    %c0_3 = arith.constant 0 : index
    %4 = vector.load %arg3[%c0_2, %c0_3] : memref<32x128xf32, #tpu.memory_space<vmem>>, vector<32x128xf32>
    %cst = arith.constant dense<0.000000e+00> : vector<16x128xf32>
    %5 = tpu.matmul %3, %4, %cst {dimension_numbers = #tpu.dot_dimension_numbers<[1], [0], [0], [1], [0, 0, 1, 1], [], []>} : vector<16x32xf32>, vector<32x128xf32>, vector<16x128xf32> -> vector<16x128xf32>
    %c0_4 = arith.constant 0 : index
    %c0_5 = arith.constant 0 : index
    %6 = vector.load %arg4[%c0_4, %c0_5] : memref<1x128xf32, #tpu.memory_space<vmem>>, vector<1x128xf32>
    %7 = vector.broadcast %6 : vector<1x128xf32> to vector<16x128xf32>
    %8 = arith.addf %5, %7 : vector<16x128xf32>
    %cst_6 = arith.constant 5.000000e-01 : f32
    %9 = vector.broadcast %cst_6 : f32 to vector<16x128xf32>
    %10 = arith.mulf %9, %8 : vector<16x128xf32>
    %cst_7 = arith.constant 0.707106769 : f32
    %11 = vector.broadcast %cst_7 : f32 to vector<16x128xf32>
    %12 = arith.mulf %8, %11 : vector<16x128xf32>
    %13 = math.erf %12 : vector<16x128xf32>
    %cst_8 = arith.constant 1.000000e+00 : f32
    %14 = vector.broadcast %cst_8 : f32 to vector<16x128xf32>
    %15 = arith.addf %14, %13 : vector<16x128xf32>
    %16 = arith.mulf %10, %15 : vector<16x128xf32>
    %c0_9 = arith.constant 0 : index
    %c0_10 = arith.constant 0 : index
    %17 = vector.load %arg8[%c0_9, %c0_10] : memref<16x32xf32, #tpu.memory_space<vmem>>, vector<16x32xf32>
    %c0_11 = arith.constant 0 : index
    %c0_12 = arith.constant 0 : index
    %18 = vector.load %arg5[%c0_11, %c0_12] : memref<128x32xf32, #tpu.memory_space<vmem>>, vector<128x32xf32>
    %cst_13 = arith.constant dense<0.000000e+00> : vector<16x32xf32>
    %19 = tpu.matmul %16, %18, %cst_13 {dimension_numbers = #tpu.dot_dimension_numbers<[1], [0], [0], [1], [0, 0, 1, 1], [], []>} : vector<16x128xf32>, vector<128x32xf32>, vector<16x32xf32> -> vector<16x32xf32>
    %20 = arith.addf %17, %19 : vector<16x32xf32>
    %c0_14 = arith.constant 0 : index
    %c0_15 = arith.constant 0 : index
    %21 = vector.load %arg8[%c0_14, %c0_15] : memref<16x32xf32, #tpu.memory_space<vmem>>, vector<16x32xf32>
    tpu.vector_store %arg8[%c0_14, %c0_15], %20 {strides = array<i32>} : memref<16x32xf32, #tpu.memory_space<vmem>>, vector<16x32xf32>,
    %c0_i32_16 = arith.constant 0 : i32
    %22 = arith.cmpi eq, %arg1, %c0_i32_16 : i32
    %23 = arith.extui %22 : i1 to i32
    %c0_i32_17 = arith.constant 0 : i32
    %24 = arith.cmpi ne, %23, %c0_i32_17 : i32
    scf.if %24 {
      %c0_18 = arith.constant 0 : index
      %c0_19 = arith.constant 0 : index
      %25 = vector.load %arg8[%c0_18, %c0_19] : memref<16x32xf32, #tpu.memory_space<vmem>>, vector<16x32xf32>
      %c0_20 = arith.constant 0 : index
      %c0_21 = arith.constant 0 : index
      %26 = vector.load %arg6[%c0_20, %c0_21] : memref<1x32xf32, #tpu.memory_space<vmem>>, vector<1x32xf32>
      %27 = vector.broadcast %26 : vector<1x32xf32> to vector<16x32xf32>
      %28 = arith.addf %25, %27 : vector<16x32xf32>
      %c0_22 = arith.constant 0 : index
      %c0_23 = arith.constant 0 : index
      %29 = vector.load %arg7[%c0_22, %c0_23] : memref<16x32xf32, #tpu.memory_space<vmem>>, vector<16x32xf32>
      tpu.vector_store %arg7[%c0_22, %c0_23], %28 {strides = array<i32>} : memref<16x32xf32, #tpu.memory_space<vmem>>, vector<16x32xf32>,
    } else {
    }
    return
  }
  func.func @transform_0(%arg0: i32, %arg1: i32) -> (i32, i32) {
    %c0_i32 = arith.constant 0 : i32
    %c0_i32_0 = arith.constant 0 : i32
    return %arg0, %c0_i32 : i32, i32
  }
  func.func @transform_1(%arg0: i32, %arg1: i32) -> (i32, i32) {
    %c0_i32 = arith.constant 0 : i32
    %c0_i32_0 = arith.constant 0 : i32
    return %c0_i32, %arg1 : i32, i32
  }
  func.func @transform_2(%arg0: i32, %arg1: i32) -> (i32, i32) {
    %c0_i32 = arith.constant 0 : i32
    %c0_i32_0 = arith.constant 0 : i32
    return %c0_i32, %arg1 : i32, i32
  }
  func.func @transform_3(%arg0: i32, %arg1: i32) -> (i32, i32) {
    %c0_i32 = arith.constant 0 : i32
    %c0_i32_0 = arith.constant 0 : i32
    return %arg1, %c0_i32 : i32, i32
  }
  func.func @transform_4(%arg0: i32, %arg1: i32) -> (i32, i32) {
    %c0_i32 = arith.constant 0 : i32
    %c0_i32_0 = arith.constant 0 : i32
    %c0_i32_1 = arith.constant 0 : i32
    return %c0_i32, %c0_i32_0 : i32, i32
  }
  func.func @transform_5(%arg0: i32, %arg1: i32) -> (i32, i32) {
    %c0_i32 = arith.constant 0 : i32
    %c0_i32_0 = arith.constant 0 : i32
    return %arg0, %c0_i32 : i32, i32
  }
}

</mosaic_0001>

<llo_original>
// kernel: tpu_custom_call.1
$region0: #{tpu_custom_call.1}
  #allocation0 [shape = 'u32[]', space=smem, size = 0x4, offset = 0x4, fixed_abs, tag = 'smem constant byte address 0x4 - core index']
  #allocation1 [shape = 'u32[72,128]{1,0:T(1,128)}', space=vmem, size = 0x9000, scoped, tag = 'internal scratch']
  #allocation2 [shape = 'f32[16,32]{1,0:T(8,128)}', space=vmem, size = 0x2000, scoped, tag = 'scratch operand']
  %s0 = inlined_call_operand.vmem [shape: f32[16,32], index: 0, kind: input, shape index: {}]
  %s1 = inlined_call_operand.vmem [shape: f32[32,128], index: 1, kind: input, shape index: {}]
  %s2 = inlined_call_operand.vmem [shape: f32[1,128], index: 2, kind: input, shape index: {}]
  %s3 = inlined_call_operand.vmem [shape: f32[128,32], index: 3, kind: input, shape index: {}]
  %s4 = inlined_call_operand.vmem [shape: f32[1,32], index: 4, kind: input, shape index: {}]
  %s5 = inlined_call_operand.hbm [shape: f32[16,32], index: 5, kind: output, shape index: {}]
  %s6 = sld [smem:[#allocation0]]
  $region38: #{tpu_custom_call.1} parent=0
    _
  %s8 = ssub.s32 1, %s6
  %s9 = scalar_select 0, %s8, %s6
  $region1: #{tpu_custom_call.1} parent=0
    #allocation3 [shape = 'u8[8192]{0}', space=vmem, size = 0x2000, scoped, tag = 'output window, operand 0, single buffered']
    #allocation4 [shape = 's32[1]{0}', space=sflag, size = 0x4, scoped, tag = 'scoped memory for tpu_custom_call.1']
    %10 = vsyncpa [#allocation4], 0
    // Predicated region
    $region2: #{tpu_custom_call.1} parent=1 // pred_check
      _
    $region3: #{tpu_custom_call.1} parent=1 // pred_check_branch
      %12 = sbr.rel (0) target = $region5
    $region4: #{tpu_custom_call.1} parent=1 // pred_region
      _
    $region5: #{tpu_custom_call.1} parent=1 // pred_fallthru
      _
    // Predicated region
    $region6: #{tpu_custom_call.1} parent=1 // pred_check
      _
    $region7: #{tpu_custom_call.1} parent=1 // pred_check_branch
      %14 = sbr.rel (0) target = $region9
    $region8: #{tpu_custom_call.1} parent=1 // pred_region
      _
    $region9: #{tpu_custom_call.1} parent=1 // pred_fallthru
      _
    // Predicated region
    $region10: #{tpu_custom_call.1} parent=1 // pred_check
      _
    $region11: #{tpu_custom_call.1} parent=1 // pred_check_branch
      %16 = sbr.rel (0) target = $region13
    $region12: #{tpu_custom_call.1} parent=1 // pred_region
      _
    $region13: #{tpu_custom_call.1} parent=1 // pred_fallthru
      _
    // Predicated region
    $region14: #{tpu_custom_call.1} parent=1 // pred_check
      _
    $region15: #{tpu_custom_call.1} parent=1 // pred_check_branch
      %18 = sbr.rel (0) target = $region17
    $region16: #{tpu_custom_call.1} parent=1 // pred_region
      _
    $region17: #{tpu_custom_call.1} parent=1 // pred_fallthru
      _
    // Predicated region
    $region18: #{tpu_custom_call.1} parent=1 // pred_check
      _
    $region19: #{tpu_custom_call.1} parent=1 // pred_check_branch
      %20 = sbr.rel (0) target = $region21
    $region20: #{tpu_custom_call.1} parent=1 // pred_region
      _
    $region21: #{tpu_custom_call.1} parent=1 // pred_fallthru
      _
    %p21 = scmp.eq.s32.totalorder 0, 0
    // Predicated region
    $region22: #{tpu_custom_call.1} parent=1 // pred_check
      %p22 = pneg %p21
    $region23: #{tpu_custom_call.1} parent=1 // pred_check_branch
      %24 = sbr.rel (%p22) target = $region25
    $region24: #{tpu_custom_call.1} parent=1 // pred_region
      %vm25 = vcmask 261120
      %26 = vst.msk [vmem:[#allocation2] sm:$0xff] %vm25, 0.0
      %27 = vst.msk [vmem:[#allocation2 + $0x8] sm:$0xff] %vm25, 0.0
    $region25: #{tpu_custom_call.1} parent=1 // pred_fallthru
      _
    %v28 = vld [vmem:[%s0] sm:$0xff]
    %v29 = vld [vmem:[%s0 + $0x8] sm:$0xff]
    %v30 = vld [vmem:[%s1] sm:$0xff]
    %v31 = vld [vmem:[%s1 + $0x8] sm:$0xff]
    %v32 = vld [vmem:[%s1 + $0x10] sm:$0xff]
    %v33 = vld [vmem:[%s1 + $0x18] sm:$0xff]
    %v34 = vld [vmem:[%s2] sm:$0x1]
    %v36 = vperm.slane %v34, 0
    %vm38 = vcmask 261120
    %v40 = vsel %vm38, %v28, 0
    %v43 = vsel %vm38, %v29, 0
    %45 = vmatpush.msra.mxu0 0.0
    %46 = vmatpush.msra.mxu0 0.0
    %47 = vmatpush.msra.mxu0 0.0
    %48 = vmatpush.msra.mxu0 0.0
    %49 = vmatpush.msra.mxu0 0.0
    %50 = vmatpush.msra.mxu0 0.0
    %51 = vmatpush.msra.mxu0 0.0
    %52 = vmatpush.msra.mxu0 0.0
    %53 = vmatpush.msra.mxu0 0.0
    %54 = vmatpush.msra.mxu0 0.0
    %55 = vmatpush.msra.mxu0 0.0
    %56 = vmatpush.msra.mxu0 0.0
    %57 = vmatpush.msra.mxu0 %v33
    %58 = vmatpush.msra.mxu0 %v32
    %59 = vmatpush.msra.mxu0 %v31
    %60 = vmatpush.msra.mxu0 %v30
    %61 = vmatmul.f32.gmra.mxu0 %v40
    %v62 = vpop.f32.mrf.mxu0
    %v63 = vadd.f32 %v36, %v62
    %64 = vmatmul.f32.gmra.mxu0 %v43
    %v65 = vpop.f32.mrf.mxu0
    %v66 = vadd.f32 %v36, %v65
    %67 = vdwg.mxu0
    %v68 = vmul.f32 %v63, 0.5
    %v69 = vmul.f32 %v66, 0.5
    %v70 = vmul.f32 %v63, 0.70710677
    %v71 = vmul.f32 %v66, 0.70710677
    %v72 = vmul.f32 %v70, %v70
    %v73 = vmin.f32 16.0, %v72
    %v74 = vmul.f32 %v73, 2.1237322e-06
    %v75 = vadd.f32 %v74, 0.00028619796
    %v76 = vmul.f32 %v73, %v75
    %v77 = vadd.f32 %v76, 0.0036580483
    %v78 = vmul.f32 %v73, %v77
    %v79 = vadd.f32 %v78, 0.05243302
    %v80 = vmul.f32 %v73, %v79
    %v81 = vadd.f32 %v80, 0.18741608
    %v82 = vmul.f32 %v73, %v81
    %v83 = vadd.f32 %v82, 1.1283791
    %v84 = vmul.f32 %v70, %v83
    %v85 = vmul.f32 %v73, 3.8918573e-05
    %v86 = vadd.f32 %v85, 0.001143296
    %v87 = vmul.f32 %v73, %v86
    %v88 = vadd.f32 %v87, 0.014752088
    %v89 = vmul.f32 %v73, %v88
    %v90 = vadd.f32 %v89, 0.112945676
    %v91 = vmul.f32 %v73, %v90
    %v92 = vadd.f32 %v91, 0.4994258
    %v93 = vmul.f32 %v73, %v92
    %v94 = vadd.f32 %v93, 1.0
    %v95 = vrcp.pop %v94
    %v96 = vmul.f32 %v94, %v95
    %v97 = vsub.f32 1.0, %v96
    %v98 = vmul.f32 %v95, %v97
    %v99 = vadd.f32 %v95, %v98
    %vm100 = vweird.f32 %v94
    %vm101 = vweird.f32 %v95
    %vm102 = vmor %vm100, %vm101
    %v103 = vsel %vm102, %v95, %v99
    %v104 = vand.u32 2147483647, %v94
    %vm105 = vcmp.eq.f32.partialorder %v104, 8.507059e+37
    %v106 = vand.u32 %v94, 2147483648
    %v107 = vor.u32 1.1754944e-38, %v106
    %v108 = vsel %vm105, %v107, %v103
    %v109 = vmul.f32 %v84, %v108
    %v110 = vmin.f32 %v109, 1.0
    %v111 = vmax.f32 %v110, -1.0
    %v112 = vmul.f32 %v71, %v71
    %v113 = vmin.f32 16.0, %v112
    %v114 = vmul.f32 %v113, 2.1237322e-06
    %v115 = vadd.f32 %v114, 0.00028619796
    %v116 = vmul.f32 %v113, %v115
    %v117 = vadd.f32 %v116, 0.0036580483
    %v118 = vmul.f32 %v113, %v117
    %v119 = vadd.f32 %v118, 0.05243302
    %v120 = vmul.f32 %v113, %v119
    %v121 = vadd.f32 %v120, 0.18741608
    %v122 = vmul.f32 %v113, %v121
    %v123 = vadd.f32 %v122, 1.1283791
    %v124 = vmul.f32 %v71, %v123
    %v125 = vmul.f32 %v113, 3.8918573e-05
    %v126 = vadd.f32 %v125, 0.001143296
    %v127 = vmul.f32 %v113, %v126
    %v128 = vadd.f32 %v127, 0.014752088
    %v129 = vmul.f32 %v113, %v128
    %v130 = vadd.f32 %v129, 0.112945676
    %v131 = vmul.f32 %v113, %v130
    %v132 = vadd.f32 %v131, 0.4994258
    %v133 = vmul.f32 %v113, %v132
    %v134 = vadd.f32 %v133, 1.0
    %v135 = vrcp.pop %v134
    %v136 = vmul.f32 %v134, %v135
    %v137 = vsub.f32 1.0, %v136
    %v138 = vmul.f32 %v135, %v137
    %v139 = vadd.f32 %v135, %v138
    %vm140 = vweird.f32 %v134
    %vm141 = vweird.f32 %v135
    %vm142 = vmor %vm140, %vm141
    %v143 = vsel %vm142, %v135, %v139
    %v144 = vand.u32 2147483647, %v134
    %vm145 = vcmp.eq.f32.partialorder %v144, 8.507059e+37
    %v146 = vand.u32 %v134, 2147483648
    %v147 = vor.u32 1.1754944e-38, %v146
    %v148 = vsel %vm145, %v147, %v143
    %v149 = vmul.f32 %v124, %v148
    %v150 = vmin.f32 %v149, 1.0
    %v151 = vmax.f32 %v150, -1.0
    %v152 = vadd.f32 %v111, 1.0
    %v153 = vadd.f32 %v151, 1.0
    %v154 = vmul.f32 %v68, %v152
    %v155 = vmul.f32 %v69, %v153
    %v156 = vld [vmem:[#allocation2] sm:$0xff]
    %v157 = vld [vmem:[#allocation2 + $0x8] sm:$0xff]
    %v158 = vld [vmem:[%s3] sm:$0xff]
    %v159 = vld [vmem:[%s3 + $0x8] sm:$0xff]
    %v160 = vld [vmem:[%s3 + $0x10] sm:$0xff]
    %v161 = vld [vmem:[%s3 + $0x18] sm:$0xff]
    %v162 = vld [vmem:[%s3 + $0x20] sm:$0xff]
    %v163 = vld [vmem:[%s3 + $0x28] sm:$0xff]
    %v164 = vld [vmem:[%s3 + $0x30] sm:$0xff]
    %v165 = vld [vmem:[%s3 + $0x38] sm:$0xff]
    %v166 = vld [vmem:[%s3 + $0x40] sm:$0xff]
    %v167 = vld [vmem:[%s3 + $0x48] sm:$0xff]
    %v168 = vld [vmem:[%s3 + $0x50] sm:$0xff]
    %v169 = vld [vmem:[%s3 + $0x58] sm:$0xff]
    %v170 = vld [vmem:[%s3 + $0x60] sm:$0xff]
    %v171 = vld [vmem:[%s3 + $0x68] sm:$0xff]
    %v172 = vld [vmem:[%s3 + $0x70] sm:$0xff]
    %v173 = vld [vmem:[%s3 + $0x78] sm:$0xff]
    %174 = vmatpush.msra.mxu0 %v173
    %175 = vmatpush.msra.mxu0 %v172
    %176 = vmatpush.msra.mxu0 %v171
    %177 = vmatpush.msra.mxu0 %v170
    %178 = vmatpush.msra.mxu0 %v169
    %179 = vmatpush.msra.mxu0 %v168
    %180 = vmatpush.msra.mxu0 %v167
    %181 = vmatpush.msra.mxu0 %v166
    %182 = vmatpush.msra.mxu0 %v165
    %183 = vmatpush.msra.mxu0 %v164
    %184 = vmatpush.msra.mxu0 %v163
    %185 = vmatpush.msra.mxu0 %v162
    %186 = vmatpush.msra.mxu0 %v161
    %187 = vmatpush.msra.mxu0 %v160
    %188 = vmatpush.msra.mxu0 %v159
    %189 = vmatpush.msra.mxu0 %v158
    %190 = vmatmul.f32.gmra.mxu0 %v154
    %v191 = vpop.f32.mrf.mxu0
    %v192 = vadd.f32 0.0, %v191
    %193 = vmatmul.f32.gmra.mxu0 %v155
    %v194 = vpop.f32.mrf.mxu0
    %v195 = vadd.f32 0.0, %v194
    %196 = vdwg.mxu0
    %v197 = vadd.f32 %v156, %v192
    %v198 = vadd.f32 %v157, %v195
    %199 = vst.msk [vmem:[#allocation2] sm:$0xff] %vm38, %v197
    %200 = vst.msk [vmem:[#allocation2 + $0x8] sm:$0xff] %vm38, %v198
    // Predicated region
    $region26: #{tpu_custom_call.1} parent=1 // pred_check
      %p201 = pneg %p21
    $region27: #{tpu_custom_call.1} parent=1 // pred_check_branch
      %203 = sbr.rel (%p201) target = $region29
    $region28: #{tpu_custom_call.1} parent=1 // pred_region
      %v204 = vld [vmem:[#allocation2] sm:$0xff]
      %v205 = vld [vmem:[#allocation2 + $0x8] sm:$0xff]
      %v206 = vld [vmem:[%s4] sm:$0x1]
      %v208 = vperm.slane %v206, 0
      %v210 = vadd.f32 %v204, %v208
      %v211 = vadd.f32 %v205, %v208
      %212 = vst.msk [vmem:[#allocation3] sm:$0xff] %vm38, %v210
      %213 = vst.msk [vmem:[#allocation3 + $0x8] sm:$0xff] %vm38, %v211
    $region29: #{tpu_custom_call.1} parent=1 // pred_fallthru
      _
    // Predicated region
    $region30: #{tpu_custom_call.1} parent=1 // pred_check
      _
    $region31: #{tpu_custom_call.1} parent=1 // pred_check_branch
      %215 = sbr.rel (0) target = $region33
    $region32: #{tpu_custom_call.1} parent=1 // pred_region
      %217 = vsyncadd [#allocation4], 0
      %s218 = sshll.u32 [#allocation3], 4
      %s219 = int_to_ptr.vmem [resolvable:$true] %s218
      %s220 = sshll.u32 %s5, 4
      %s221 = int_to_ptr.hbm [resolvable:$true] %s220
      %226 = dma.vmem_to_hbm [thread:$0]  %s219, 256, %s221, [#allocation4], 128, 128, 8
    $region33: #{tpu_custom_call.1} parent=1 // pred_fallthru
      _
    // Predicated region
    $region34: #{tpu_custom_call.1} parent=1 // pred_check
      _
    $region35: #{tpu_custom_call.1} parent=1 // pred_check_branch
      %228 = sbr.rel (0) target = $region37
    $region36: #{tpu_custom_call.1} parent=1 // pred_region
      %230 = dma.done [#allocation4], 256
    $region37: #{tpu_custom_call.1} parent=1 // pred_fallthru
      _
    %231 = vsyncpa [#allocation4], 1

</llo_original>
